<compile_context>
chip_gen: v5e
topology: v5e:2x2
jax: 0.10.0
libtpu: 0.0.40
codegen_flags: <defaults>
</compile_context>

<pallas_src>
import functools
import math

import jax
import jax.numpy as jnp
from jax.experimental import pallas as pl
from jax.experimental.pallas import tpu as pltpu

_LANES = 128


def _round_up(x, m):
    return ((x + m - 1) // m) * m


def _vmem_limit_bytes():
    """VMEM scoped limit with headroom (v7x: 64 MiB phys, v5e/v6e: 128 MiB)."""
    cap = 64 * 1024 * 1024
    try:
        info = pltpu.get_tpu_info()
        cap = int(getattr(info, "vmem_capacity_bytes", cap) or cap)
    except Exception:
        pass
    return int(min(cap * 3 // 4, 96 * 1024 * 1024))


def _norm_kernel(*refs, eps, d_model, approx, folded):
    if folded:
        x_ref, seg_ref, alpha_ref, bias_ref, o_ref = refs
    else:
        x_ref, alpha_ref, bias_ref, o_ref = refs

    x = x_ref[...].astype(jnp.float32)        # (tile_rows, dk), f32 accumulation
    alpha = alpha_ref[...]                    # (1, dk), f32 (cast hoisted to wrapper)
    bias = bias_ref[...]                      # (1, dk), f32

    if folded:
        # Block-diagonal ones matrix: one MXU matmul yields the per-group sum
        # already broadcast to every lane of the group (MXU is idle otherwise).
        seg = seg_ref[...]                    # (dk, dk)
        ssum = jnp.dot(x, seg, preferred_element_type=jnp.float32,
                       precision=jax.lax.Precision.HIGHEST)
    else:
        ssum = jnp.sum(x, axis=-1, keepdims=True)

    mean = ssum * (1.0 / d_model)
    xc = x - mean                             # reused for the variance pass

    if folded:
        ssq = jnp.dot(xc * xc, seg, preferred_element_type=jnp.float32,
                      precision=jax.lax.Precision.HIGHEST)
    else:
        ssq = jnp.sum(xc * xc, axis=-1, keepdims=True)

    # PyTorch x.std() is the *unbiased* std (ddof=1); eps is added to the std.
    # TODO(synk): d_model == 1 returns `bias` here; PyTorch would produce NaN.
    std = jnp.sqrt(ssq * (1.0 / max(d_model - 1, 1)))
    inv = pl.reciprocal(std + eps, approx=approx)   # multiply-by-inverse
    o_ref[...] = (alpha * (xc * inv) + bias).astype(o_ref.dtype)


def norm_forward(x, alpha, bias, eps=1e-6, *, approx_reciprocal=None):
    """Pallas TPU implementation of the PyTorch `Norm` module forward."""
    orig_shape = x.shape
    d_model = orig_shape[-1]
    rows = 1
    for s in orig_shape[:-1]:
        rows *= int(s)
    rows = max(rows, 1)

    if approx_reciprocal is None:
        # approx reciprocal (~2^-12 rel err) only when output precision tolerates it.
        approx_reciprocal = jnp.dtype(x.dtype) in (jnp.dtype(jnp.bfloat16),
                                                   jnp.dtype(jnp.float16))

    # Lane-density fold: pack g rows into the 128-lane axis when d_model is narrow.
    # g must divide rows so the fold is a free contiguous reshape (no jnp.pad pass).
    g = 1
    if 8 <= d_model < _LANES and _LANES % d_model == 0:
        g = math.gcd(_LANES // d_model, rows)
        if g < 2:
            g = 1
    # TODO(synk): d_model values that don't divide 128 (e.g. 96) or rows coprime
    # with 128//d_model still take the lane-sparse g=1 path (masked vst).
    dk = g * d_model
    super_rows = rows // g
    folded = g > 1

    itemsize = jnp.dtype(x.dtype).itemsize
    sublane = {4: 8, 2: 16, 1: 32}.get(itemsize, 8)

    # --- Tile sizing ----------------------------------------------------------
    # Per super-row VMEM footprint: double-buffered in + out, plus ~3 full-tile
    # f32 temporaries (x, xc, segmented-sum result). Budget ~0.8x of the limit
    # (no extra halving), cap at the ~1024-row pipelining plateau, and aim for
    # >= 8 grid steps when there is enough work so DMA/compute overlap and both
    # TensorCores (v7x) stay busy.
    vmem_limit = _vmem_limit_bytes()
    budget = (vmem_limit * 4) // 5
    per_row_bytes = 2 * dk * itemsize * 2 + 3 * dk * 4
    tile_rows = (budget // per_row_bytes) // sublane * sublane
    tile_rows = max(sublane, min(tile_rows, 1024))

    min_steps = 8
    if super_rows >= min_steps * sublane:
        tile_rows = min(tile_rows, _round_up(-(-super_rows // min_steps), sublane))
    tile_rows = min(tile_rows, _round_up(super_rows, sublane))
    tile_rows = max(tile_rows, sublane)

    grid = pl.cdiv(super_rows, tile_rows)   # ragged final block handled by Pallas

    # --- Operand views (all copy-free reshapes, no padding pass) --------------
    x2d = x.reshape(super_rows, dk)

    # Hoist f32 casts of the (tiny) params; replicate across folded lane groups.
    alpha_k = jnp.tile(alpha.astype(jnp.float32).reshape(-1), g).reshape(1, dk)
    bias_k = jnp.tile(bias.astype(jnp.float32).reshape(-1), g).reshape(1, dk)

    inputs = [x2d]
    in_specs = [pl.BlockSpec((tile_rows, dk), lambda i: (i, 0))]
    if folded:
        lane_group = jnp.arange(dk, dtype=jnp.int32) // d_model
        seg = (lane_group[:, None] == lane_group[None, :]).astype(jnp.float32)
        inputs.append(seg)
        in_specs.append(pl.BlockSpec((dk, dk), lambda i: (0, 0)))
    inputs += [alpha_k, bias_k]
    in_specs += [pl.BlockSpec((1, dk), lambda i: (0, 0)),
                 pl.BlockSpec((1, dk), lambda i: (0, 0))]

    kernel = functools.partial(_norm_kernel, eps=eps, d_model=d_model,
                               approx=approx_reciprocal, folded=folded)

    out = pl.pallas_call(
        kernel,
        out_shape=jax.ShapeDtypeStruct((super_rows, dk), x.dtype),
        grid_spec=pltpu.PrefetchScalarGridSpec(
            num_scalar_prefetch=0,
            grid=(grid,),
            in_specs=in_specs,
            out_specs=pl.BlockSpec((tile_rows, dk), lambda i: (i, 0)),
        ),
        compiler_params=pltpu.CompilerParams(
            dimension_semantics=("parallel",),
            vmem_limit_bytes=vmem_limit,
        ),
    )(*inputs)

    return out.reshape(orig_shape)


def _reference(x, alpha, bias, eps):
    d = x.shape[-1]
    mean = jnp.mean(x, axis=-1, keepdims=True)
    std = jnp.sqrt(jnp.sum((x - mean) ** 2, axis=-1, keepdims=True) / (d - 1))
    return alpha * (x - mean) / (std + eps) + bias


if __name__ == "__main__":
    key = jax.random.PRNGKey(0)

    # Case 1: small d_model (lane-dense folded path, MXU segmented sum).
    d_model = 32
    batch, seq = 2, 8
    x = jax.random.normal(key, (batch, seq, d_model), dtype=jnp.float32)
    alpha = jnp.ones((d_model,), dtype=jnp.float32)
    bias = jnp.zeros((d_model,), dtype=jnp.float32)

    out = norm_forward(x, alpha, bias, eps=1e-6)
    jax.block_until_ready(out)
    ref = _reference(x, alpha, bias, 1e-6)
    assert out.shape == x.shape
    assert jnp.allclose(out, ref, atol=1e-5, rtol=1e-5), float(jnp.max(jnp.abs(out - ref)))

    # Case 2: d_model >= 128 with a ragged row count (no padding, ragged last block).
    d_model2 = 256
    x2 = jax.random.normal(jax.random.PRNGKey(1), (2, 5, d_model2), dtype=jnp.float32)
    alpha2 = jax.random.normal(jax.random.PRNGKey(2), (d_model2,), dtype=jnp.float32)
    bias2 = jax.random.normal(jax.random.PRNGKey(3), (d_model2,), dtype=jnp.float32)
    out2 = norm_forward(x2, alpha2, bias2, eps=1e-6)
    jax.block_until_ready(out2)
    ref2 = _reference(x2, alpha2, bias2, 1e-6)
    assert jnp.allclose(out2, ref2, atol=1e-5, rtol=1e-5), float(jnp.max(jnp.abs(out2 - ref2)))

    print("KERNEL_OK")
</pallas_src>

<mosaic_0001>
module attributes {stable_mosaic.version = 11 : i64} {
  func.func @_norm_kernel(%arg0: i32, %arg1: memref<8x128xf32, #tpu.memory_space<vmem>>, %arg2: memref<128x128xf32, #tpu.memory_space<vmem>>, %arg3: memref<1x128xf32, #tpu.memory_space<vmem>>, %arg4: memref<1x128xf32, #tpu.memory_space<vmem>>, %arg5: memref<8x128xf32, #tpu.memory_space<vmem>>) attributes {dimension_semantics = [#tpu.dimension_semantics<parallel>], iteration_bounds = array<i64: 1>, scalar_prefetch = 0 : i64, scratch_operands = 0 : i64, tpu.core_type = #tpu.core_type<tc>, window_params = [{transform_indices = @transform_0, window_bounds = array<i64: 8, 128>}, {pipeline_mode = #tpu.pipeline_mode<synchronous>, transform_indices = @transform_1, window_bounds = array<i64: 128, 128>}, {pipeline_mode = #tpu.pipeline_mode<synchronous>, transform_indices = @transform_2, window_bounds = array<i64: 1, 128>}, {pipeline_mode = #tpu.pipeline_mode<synchronous>, transform_indices = @transform_3, window_bounds = array<i64: 1, 128>}, {transform_indices = @transform_4, window_bounds = array<i64: 8, 128>}]} {
    %c0 = arith.constant 0 : index
    %c0_0 = arith.constant 0 : index
    %0 = vector.load %arg1[%c0, %c0_0] : memref<8x128xf32, #tpu.memory_space<vmem>>, vector<8x128xf32>
    %c0_1 = arith.constant 0 : index
    %c0_2 = arith.constant 0 : index
    %1 = vector.load %arg3[%c0_1, %c0_2] : memref<1x128xf32, #tpu.memory_space<vmem>>, vector<1x128xf32>
    %c0_3 = arith.constant 0 : index
    %c0_4 = arith.constant 0 : index
    %2 = vector.load %arg4[%c0_3, %c0_4] : memref<1x128xf32, #tpu.memory_space<vmem>>, vector<1x128xf32>
    %c0_5 = arith.constant 0 : index
    %c0_6 = arith.constant 0 : index
    %3 = vector.load %arg2[%c0_5, %c0_6] : memref<128x128xf32, #tpu.memory_space<vmem>>, vector<128x128xf32>
    %cst = arith.constant dense<0.000000e+00> : vector<8x128xf32>
    %4 = tpu.matmul %0, %3, %cst {dimension_numbers = #tpu.dot_dimension_numbers<[1], [0], [0], [1], [0, 0, 1, 1], [], []>, precision = #tpu.contract_precision<fp32>} : vector<8x128xf32>, vector<128x128xf32>, vector<8x128xf32> -> vector<8x128xf32>
    %cst_7 = arith.constant 3.125000e-02 : f32
    %5 = vector.broadcast %cst_7 : f32 to vector<8x128xf32>
    %6 = arith.mulf %4, %5 : vector<8x128xf32>
    %7 = arith.subf %0, %6 : vector<8x128xf32>
    %8 = arith.mulf %7, %7 : vector<8x128xf32>
    %cst_8 = arith.constant dense<0.000000e+00> : vector<8x128xf32>
    %9 = tpu.matmul %8, %3, %cst_8 {dimension_numbers = #tpu.dot_dimension_numbers<[1], [0], [0], [1], [0, 0, 1, 1], [], []>, precision = #tpu.contract_precision<fp32>} : vector<8x128xf32>, vector<128x128xf32>, vector<8x128xf32> -> vector<8x128xf32>
    %cst_9 = arith.constant 0.0322580636 : f32
    %10 = vector.broadcast %cst_9 : f32 to vector<8x128xf32>
    %11 = arith.mulf %9, %10 : vector<8x128xf32>
    %12 = math.sqrt %11 : vector<8x128xf32>
    %cst_10 = arith.constant 9.99999997E-7 : f32
    %13 = vector.broadcast %cst_10 : f32 to vector<8x128xf32>
    %14 = arith.addf %12, %13 : vector<8x128xf32>
    %15 = tpu.reciprocal %14 : vector<8x128xf32> -> vector<8x128xf32>
    %16 = arith.mulf %7, %15 : vector<8x128xf32>
    %17 = vector.broadcast %1 : vector<1x128xf32> to vector<8x128xf32>
    %18 = arith.mulf %17, %16 : vector<8x128xf32>
    %19 = vector.broadcast %2 : vector<1x128xf32> to vector<8x128xf32>
    %20 = arith.addf %18, %19 : vector<8x128xf32>
    %c0_11 = arith.constant 0 : index
    %c0_12 = arith.constant 0 : index
    %21 = vector.load %arg5[%c0_11, %c0_12] : memref<8x128xf32, #tpu.memory_space<vmem>>, vector<8x128xf32>
    tpu.vector_store %arg5[%c0_11, %c0_12], %20 {strides = array<i32>} : memref<8x128xf32, #tpu.memory_space<vmem>>, vector<8x128xf32>,
    return
  }
  func.func @transform_0(%arg0: i32) -> (i32, i32) {
    %c0_i32 = arith.constant 0 : i32
    %c0_i32_0 = arith.constant 0 : i32
    return %arg0, %c0_i32 : i32, i32
  }
  func.func @transform_1(%arg0: i32) -> (i32, i32) {
    %c0_i32 = arith.constant 0 : i32
    %c0_i32_0 = arith.constant 0 : i32
    %c0_i32_1 = arith.constant 0 : i32
    return %c0_i32, %c0_i32_0 : i32, i32
  }
  func.func @transform_2(%arg0: i32) -> (i32, i32) {
    %c0_i32 = arith.constant 0 : i32
    %c0_i32_0 = arith.constant 0 : i32
    %c0_i32_1 = arith.constant 0 : i32
    return %c0_i32, %c0_i32_0 : i32, i32
  }
  func.func @transform_3(%arg0: i32) -> (i32, i32) {
    %c0_i32 = arith.constant 0 : i32
    %c0_i32_0 = arith.constant 0 : i32
    %c0_i32_1 = arith.constant 0 : i32
    return %c0_i32, %c0_i32_0 : i32, i32
  }
  func.func @transform_4(%arg0: i32) -> (i32, i32) {
    %c0_i32 = arith.constant 0 : i32
    %c0_i32_0 = arith.constant 0 : i32
    return %arg0, %c0_i32 : i32, i32
  }
}

</mosaic_0001>

<llo_original>
// kernel: tpu_custom_call.1
$region0: #{tpu_custom_call.1}
  #allocation0 [shape = 'u32[]', space=smem, size = 0x4, offset = 0x4, fixed_abs, tag = 'smem constant byte address 0x4 - core index']
  #allocation1 [shape = 'u32[72,128]{1,0:T(1,128)}', space=vmem, size = 0x9000, scoped, tag = 'internal scratch']
  %s0 = inlined_call_operand.hbm [shape: f32[4,128], index: 0, kind: input, shape index: {}]
  %s1 = inlined_call_operand.hbm [shape: f32[128,128], index: 1, kind: input, shape index: {}]
  %s2 = inlined_call_operand.vmem [shape: f32[1,128], index: 2, kind: input, shape index: {}]
  %s3 = inlined_call_operand.vmem [shape: f32[1,128], index: 3, kind: input, shape index: {}]
  %s4 = inlined_call_operand.hbm [shape: f32[4,128], index: 4, kind: output, shape index: {}]
  %s5 = sld [smem:[#allocation0]]
  $region34: #{tpu_custom_call.1} parent=0
    _
  %s7 = ssub.s32 1, %s5
  %s8 = scalar_select 0, %s7, %s5
  $region1: #{tpu_custom_call.1} parent=0
    #allocation2 [shape = 'u8[4096]{0}', space=vmem, size = 0x1000, scoped, tag = 'input window, operand 0, single buffered']
    #allocation3 [shape = 's32[1]{0}', space=sflag, size = 0x4, scoped, tag = 'scoped memory for tpu_custom_call.1']
    #allocation4 [shape = 's32[1]{0}', space=sflag, size = 0x4, scoped, tag = 'scoped memory for tpu_custom_call.1']
    #allocation5 [shape = 'u8[65536]{0}', space=vmem, size = 0x10000, scoped, tag = 'input window, operand 1, single buffered']
    #allocation6 [shape = 's32[1]{0}', space=sflag, size = 0x4, scoped, tag = 'scoped memory for tpu_custom_call.1']
    #allocation7 [shape = 'u8[4096]{0}', space=vmem, size = 0x1000, scoped, tag = 'output window, operand 0, single buffered']
    %9 = vsyncpa [#allocation3], 0
    %10 = vsyncpa [#allocation6], 0
    %11 = vsyncpa [#allocation4], 0
    // Predicated region
    $region2: #{tpu_custom_call.1} parent=1 // pred_check
      _
    $region3: #{tpu_custom_call.1} parent=1 // pred_check_branch
      %13 = sbr.rel (0) target = $region5
    $region4: #{tpu_custom_call.1} parent=1 // pred_region
      %15 = vsyncadd [#allocation3], 64
      %s16 = sshll.u32 %s0, 4
      %s17 = int_to_ptr.hbm [resolvable:$true] %s16
      %s18 = sshll.u32 [#allocation2], 4
      %s19 = int_to_ptr.vmem [resolvable:$true] %s18
      %24 = dma.hbm_to_vmem [thread:$0]  %s17, 64, %s19, [#allocation3], 64, 64, 4
    $region5: #{tpu_custom_call.1} parent=1 // pred_fallthru
      _
    // Predicated region
    $region6: #{tpu_custom_call.1} parent=1 // pred_check
      _
    $region7: #{tpu_custom_call.1} parent=1 // pred_check_branch
      %26 = sbr.rel (0) target = $region9
    $region8: #{tpu_custom_call.1} parent=1 // pred_region
      %28 = vsyncadd [#allocation6], 0
      %s29 = sshll.u32 %s1, 4
      %s30 = int_to_ptr.hbm [resolvable:$true] %s29
      %s31 = sshll.u32 [#allocation5], 4
      %s32 = int_to_ptr.vmem [resolvable:$true] %s31
      %37 = dma.hbm_to_vmem [thread:$0]  %s30, 2048, %s32, [#allocation6], 128, 128, 8
    $region9: #{tpu_custom_call.1} parent=1 // pred_fallthru
      _
    // Predicated region
    $region10: #{tpu_custom_call.1} parent=1 // pred_check
      _
    $region11: #{tpu_custom_call.1} parent=1 // pred_check_branch
      %39 = sbr.rel (0) target = $region13
    $region12: #{tpu_custom_call.1} parent=1 // pred_region
      _
    $region13: #{tpu_custom_call.1} parent=1 // pred_fallthru
      _
    // Predicated region
    $region14: #{tpu_custom_call.1} parent=1 // pred_check
      _
    $region15: #{tpu_custom_call.1} parent=1 // pred_check_branch
      %41 = sbr.rel (0) target = $region17
    $region16: #{tpu_custom_call.1} parent=1 // pred_region
      _
    $region17: #{tpu_custom_call.1} parent=1 // pred_fallthru
      _
    // Predicated region
    $region18: #{tpu_custom_call.1} parent=1 // pred_check
      _
    $region19: #{tpu_custom_call.1} parent=1 // pred_check_branch
      %43 = sbr.rel (0) target = $region21
    $region20: #{tpu_custom_call.1} parent=1 // pred_region
      %45 = dma.done [#allocation3], 128
    $region21: #{tpu_custom_call.1} parent=1 // pred_fallthru
      _
    // Predicated region
    $region22: #{tpu_custom_call.1} parent=1 // pred_check
      _
    $region23: #{tpu_custom_call.1} parent=1 // pred_check_branch
      %47 = sbr.rel (0) target = $region25
    $region24: #{tpu_custom_call.1} parent=1 // pred_region
      %49 = dma.done [#allocation6], 2048
    $region25: #{tpu_custom_call.1} parent=1 // pred_fallthru
      _
    %v50 = vld [vmem:[#allocation2] sm:$0xff]
    %v51 = vld [vmem:[%s2] sm:$0x1]
    %v52 = vld [vmem:[%s3] sm:$0x1]
    %v53 = vld [vmem:[#allocation5] sm:$0xff]
    %v54 = vld [vmem:[#allocation5 + $0x8] sm:$0xff]
    %v55 = vld [vmem:[#allocation5 + $0x10] sm:$0xff]
    %v56 = vld [vmem:[#allocation5 + $0x18] sm:$0xff]
    %v57 = vld [vmem:[#allocation5 + $0x20] sm:$0xff]
    %v58 = vld [vmem:[#allocation5 + $0x28] sm:$0xff]
    %v59 = vld [vmem:[#allocation5 + $0x30] sm:$0xff]
    %v60 = vld [vmem:[#allocation5 + $0x38] sm:$0xff]
    %v61 = vld [vmem:[#allocation5 + $0x40] sm:$0xff]
    %v62 = vld [vmem:[#allocation5 + $0x48] sm:$0xff]
    %v63 = vld [vmem:[#allocation5 + $0x50] sm:$0xff]
    %v64 = vld [vmem:[#allocation5 + $0x58] sm:$0xff]
    %v65 = vld [vmem:[#allocation5 + $0x60] sm:$0xff]
    %v66 = vld [vmem:[#allocation5 + $0x68] sm:$0xff]
    %v67 = vld [vmem:[#allocation5 + $0x70] sm:$0xff]
    %v68 = vld [vmem:[#allocation5 + $0x78] sm:$0xff]
    %v69 = vand.u32 %v68, 4294901760
    %70 = vmatpush.msra.mxu0 %v69
    %v71 = vand.u32 %v67, 4294901760
    %72 = vmatpush.msra.mxu0 %v71
    %v73 = vand.u32 %v66, 4294901760
    %74 = vmatpush.msra.mxu0 %v73
    %v75 = vand.u32 %v65, 4294901760
    %76 = vmatpush.msra.mxu0 %v75
    %v77 = vand.u32 %v64, 4294901760
    %78 = vmatpush.msra.mxu0 %v77
    %v79 = vand.u32 %v63, 4294901760
    %80 = vmatpush.msra.mxu0 %v79
    %v81 = vand.u32 %v62, 4294901760
    %82 = vmatpush.msra.mxu0 %v81
    %v83 = vand.u32 %v61, 4294901760
    %84 = vmatpush.msra.mxu0 %v83
    %v85 = vand.u32 %v60, 4294901760
    %86 = vmatpush.msra.mxu0 %v85
    %v87 = vand.u32 %v59, 4294901760
    %88 = vmatpush.msra.mxu0 %v87
    %v89 = vand.u32 %v58, 4294901760
    %90 = vmatpush.msra.mxu0 %v89
    %v91 = vand.u32 %v57, 4294901760
    %92 = vmatpush.msra.mxu0 %v91
    %v93 = vand.u32 %v56, 4294901760
    %94 = vmatpush.msra.mxu0 %v93
    %v95 = vand.u32 %v55, 4294901760
    %96 = vmatpush.msra.mxu0 %v95
    %v97 = vand.u32 %v54, 4294901760
    %98 = vmatpush.msra.mxu0 %v97
    %v99 = vand.u32 %v53, 4294901760
    %100 = vmatpush.msra.mxu0 %v99
    %v101 = vand.u32 %v50, 4294901760
    %v102 = vsub.f32 %v50, %v101
    %v103 = vand.u32 %v102, 4294901760
    %v104 = vsub.f32 %v102, %v103
    %v105 = vand.u32 %v104, 4294901760
    %106 = vmatmul.f32.gmra.mxu0 %v105
    %v107 = vpop.f32.mrf.mxu0
    %v108 = vadd.f32 0.0, %v107
    %109 = vdwg.mxu0
    %v110 = vand.u32 %v68, 4294901760
    %v111 = vsub.f32 %v68, %v110
    %v112 = vand.u32 %v111, 4294901760
    %v113 = vsub.f32 %v111, %v112
    %v114 = vand.u32 %v113, 4294901760
    %115 = vmatpush.msra.mxu0 %v114
    %v116 = vand.u32 %v67, 4294901760
    %v117 = vsub.f32 %v67, %v116
    %v118 = vand.u32 %v117, 4294901760
    %v119 = vsub.f32 %v117, %v118
    %v120 = vand.u32 %v119, 4294901760
    %121 = vmatpush.msra.mxu0 %v120
    %v122 = vand.u32 %v66, 4294901760
    %v123 = vsub.f32 %v66, %v122
    %v124 = vand.u32 %v123, 4294901760
    %v125 = vsub.f32 %v123, %v124
    %v126 = vand.u32 %v125, 4294901760
    %127 = vmatpush.msra.mxu0 %v126
    %v128 = vand.u32 %v65, 4294901760
    %v129 = vsub.f32 %v65, %v128
    %v130 = vand.u32 %v129, 4294901760
    %v131 = vsub.f32 %v129, %v130
    %v132 = vand.u32 %v131, 4294901760
    %133 = vmatpush.msra.mxu0 %v132
    %v134 = vand.u32 %v64, 4294901760
    %v135 = vsub.f32 %v64, %v134
    %v136 = vand.u32 %v135, 4294901760
    %v137 = vsub.f32 %v135, %v136
    %v138 = vand.u32 %v137, 4294901760
    %139 = vmatpush.msra.mxu0 %v138
    %v140 = vand.u32 %v63, 4294901760
    %v141 = vsub.f32 %v63, %v140
    %v142 = vand.u32 %v141, 4294901760
    %v143 = vsub.f32 %v141, %v142
    %v144 = vand.u32 %v143, 4294901760
    %145 = vmatpush.msra.mxu0 %v144
    %v146 = vand.u32 %v62, 4294901760
    %v147 = vsub.f32 %v62, %v146
    %v148 = vand.u32 %v147, 4294901760
    %v149 = vsub.f32 %v147, %v148
    %v150 = vand.u32 %v149, 4294901760
    %151 = vmatpush.msra.mxu0 %v150
    %v152 = vand.u32 %v61, 4294901760
    %v153 = vsub.f32 %v61, %v152
    %v154 = vand.u32 %v153, 4294901760
    %v155 = vsub.f32 %v153, %v154
    %v156 = vand.u32 %v155, 4294901760
    %157 = vmatpush.msra.mxu0 %v156
    %v158 = vand.u32 %v60, 4294901760
    %v159 = vsub.f32 %v60, %v158
    %v160 = vand.u32 %v159, 4294901760
    %v161 = vsub.f32 %v159, %v160
    %v162 = vand.u32 %v161, 4294901760
    %163 = vmatpush.msra.mxu0 %v162
    %v164 = vand.u32 %v59, 4294901760
    %v165 = vsub.f32 %v59, %v164
    %v166 = vand.u32 %v165, 4294901760
    %v167 = vsub.f32 %v165, %v166
    %v168 = vand.u32 %v167, 4294901760
    %169 = vmatpush.msra.mxu0 %v168
    %v170 = vand.u32 %v58, 4294901760
    %v171 = vsub.f32 %v58, %v170
    %v172 = vand.u32 %v171, 4294901760
    %v173 = vsub.f32 %v171, %v172
    %v174 = vand.u32 %v173, 4294901760
    %175 = vmatpush.msra.mxu0 %v174
    %v176 = vand.u32 %v57, 4294901760
    %v177 = vsub.f32 %v57, %v176
    %v178 = vand.u32 %v177, 4294901760
    %v179 = vsub.f32 %v177, %v178
    %v180 = vand.u32 %v179, 4294901760
    %181 = vmatpush.msra.mxu0 %v180
    %v182 = vand.u32 %v56, 4294901760
    %v183 = vsub.f32 %v56, %v182
    %v184 = vand.u32 %v183, 4294901760
    %v185 = vsub.f32 %v183, %v184
    %v186 = vand.u32 %v185, 4294901760
    %187 = vmatpush.msra.mxu0 %v186
    %v188 = vand.u32 %v55, 4294901760
    %v189 = vsub.f32 %v55, %v188
    %v190 = vand.u32 %v189, 4294901760
    %v191 = vsub.f32 %v189, %v190
    %v192 = vand.u32 %v191, 4294901760
    %193 = vmatpush.msra.mxu0 %v192
    %v194 = vand.u32 %v54, 4294901760
    %v195 = vsub.f32 %v54, %v194
    %v196 = vand.u32 %v195, 4294901760
    %v197 = vsub.f32 %v195, %v196
    %v198 = vand.u32 %v197, 4294901760
    %199 = vmatpush.msra.mxu0 %v198
    %v200 = vand.u32 %v53, 4294901760
    %v201 = vsub.f32 %v53, %v200
    %v202 = vand.u32 %v201, 4294901760
    %v203 = vsub.f32 %v201, %v202
    %v204 = vand.u32 %v203, 4294901760
    %205 = vmatpush.msra.mxu0 %v204
    %v206 = vand.u32 %v50, 4294901760
    %207 = vmatmul.f32.gmra.mxu0 %v206
    %v208 = vpop.f32.mrf.mxu0
    %v209 = vadd.f32 %v108, %v208
    %210 = vdwg.mxu0
    %v211 = vand.u32 %v68, 4294901760
    %v212 = vsub.f32 %v68, %v211
    %213 = vmatpush.msra.mxu0 %v212
    %v214 = vand.u32 %v67, 4294901760
    %v215 = vsub.f32 %v67, %v214
    %216 = vmatpush.msra.mxu0 %v215
    %v217 = vand.u32 %v66, 4294901760
    %v218 = vsub.f32 %v66, %v217
    %219 = vmatpush.msra.mxu0 %v218
    %v220 = vand.u32 %v65, 4294901760
    %v221 = vsub.f32 %v65, %v220
    %222 = vmatpush.msra.mxu0 %v221
    %v223 = vand.u32 %v64, 4294901760
    %v224 = vsub.f32 %v64, %v223
    %225 = vmatpush.msra.mxu0 %v224
    %v226 = vand.u32 %v63, 4294901760
    %v227 = vsub.f32 %v63, %v226
    %228 = vmatpush.msra.mxu0 %v227
    %v229 = vand.u32 %v62, 4294901760
    %v230 = vsub.f32 %v62, %v229
    %231 = vmatpush.msra.mxu0 %v230
    %v232 = vand.u32 %v61, 4294901760
    %v233 = vsub.f32 %v61, %v232
    %234 = vmatpush.msra.mxu0 %v233
    %v235 = vand.u32 %v60, 4294901760
    %v236 = vsub.f32 %v60, %v235
    %237 = vmatpush.msra.mxu0 %v236
    %v238 = vand.u32 %v59, 4294901760
    %v239 = vsub.f32 %v59, %v238
    %240 = vmatpush.msra.mxu0 %v239
    %v241 = vand.u32 %v58, 4294901760
    %v242 = vsub.f32 %v58, %v241
    %243 = vmatpush.msra.mxu0 %v242
    %v244 = vand.u32 %v57, 4294901760
    %v245 = vsub.f32 %v57, %v244
    %246 = vmatpush.msra.mxu0 %v245
    %v247 = vand.u32 %v56, 4294901760
    %v248 = vsub.f32 %v56, %v247
    %249 = vmatpush.msra.mxu0 %v248
    %v250 = vand.u32 %v55, 4294901760
    %v251 = vsub.f32 %v55, %v250
    %252 = vmatpush.msra.mxu0 %v251
    %v253 = vand.u32 %v54, 4294901760
    %v254 = vsub.f32 %v54, %v253
    %255 = vmatpush.msra.mxu0 %v254
    %v256 = vand.u32 %v53, 4294901760
    %v257 = vsub.f32 %v53, %v256
    %258 = vmatpush.msra.mxu0 %v257
    %v259 = vand.u32 %v50, 4294901760
    %v260 = vsub.f32 %v50, %v259
    %261 = vmatmul.f32.gmra.mxu0 %v260
    %v262 = vpop.f32.mrf.mxu0
    %v263 = vadd.f32 %v209, %v262
    %264 = vdwg.mxu0
    %v265 = vand.u32 %v68, 4294901760
    %266 = vmatpush.msra.mxu0 %v265
    %v267 = vand.u32 %v67, 4294901760
    %268 = vmatpush.msra.mxu0 %v267
    %v269 = vand.u32 %v66, 4294901760
    %270 = vmatpush.msra.mxu0 %v269
    %v271 = vand.u32 %v65, 4294901760
    %272 = vmatpush.msra.mxu0 %v271
    %v273 = vand.u32 %v64, 4294901760
    %274 = vmatpush.msra.mxu0 %v273
    %v275 = vand.u32 %v63, 4294901760
    %276 = vmatpush.msra.mxu0 %v275
    %v277 = vand.u32 %v62, 4294901760
    %278 = vmatpush.msra.mxu0 %v277
    %v279 = vand.u32 %v61, 4294901760
    %280 = vmatpush.msra.mxu0 %v279
    %v281 = vand.u32 %v60, 4294901760
    %282 = vmatpush.msra.mxu0 %v281
    %v283 = vand.u32 %v59, 4294901760
    %284 = vmatpush.msra.mxu0 %v283
    %v285 = vand.u32 %v58, 4294901760
    %286 = vmatpush.msra.mxu0 %v285
    %v287 = vand.u32 %v57, 4294901760
    %288 = vmatpush.msra.mxu0 %v287
    %v289 = vand.u32 %v56, 4294901760
    %290 = vmatpush.msra.mxu0 %v289
    %v291 = vand.u32 %v55, 4294901760
    %292 = vmatpush.msra.mxu0 %v291
    %v293 = vand.u32 %v54, 4294901760
    %294 = vmatpush.msra.mxu0 %v293
    %v295 = vand.u32 %v53, 4294901760
    %296 = vmatpush.msra.mxu0 %v295
    %v297 = vand.u32 %v50, 4294901760
    %v298 = vsub.f32 %v50, %v297
    %v299 = vand.u32 %v298, 4294901760
    %300 = vmatmul.f32.gmra.mxu0 %v299
    %v301 = vpop.f32.mrf.mxu0
    %v302 = vadd.f32 %v263, %v301
    %303 = vdwg.mxu0
    %v304 = vand.u32 %v68, 4294901760
    %v305 = vsub.f32 %v68, %v304
    %v306 = vand.u32 %v305, 4294901760
    %307 = vmatpush.msra.mxu0 %v306
    %v308 = vand.u32 %v67, 4294901760
    %v309 = vsub.f32 %v67, %v308
    %v310 = vand.u32 %v309, 4294901760
    %311 = vmatpush.msra.mxu0 %v310
    %v312 = vand.u32 %v66, 4294901760
    %v313 = vsub.f32 %v66, %v312
    %v314 = vand.u32 %v313, 4294901760
    %315 = vmatpush.msra.mxu0 %v314
    %v316 = vand.u32 %v65, 4294901760
    %v317 = vsub.f32 %v65, %v316
    %v318 = vand.u32 %v317, 4294901760
    %319 = vmatpush.msra.mxu0 %v318
    %v320 = vand.u32 %v64, 4294901760
    %v321 = vsub.f32 %v64, %v320
    %v322 = vand.u32 %v321, 4294901760
    %323 = vmatpush.msra.mxu0 %v322
    %v324 = vand.u32 %v63, 4294901760
    %v325 = vsub.f32 %v63, %v324
    %v326 = vand.u32 %v325, 4294901760
    %327 = vmatpush.msra.mxu0 %v326
    %v328 = vand.u32 %v62, 4294901760
    %v329 = vsub.f32 %v62, %v328
    %v330 = vand.u32 %v329, 4294901760
    %331 = vmatpush.msra.mxu0 %v330
    %v332 = vand.u32 %v61, 4294901760
    %v333 = vsub.f32 %v61, %v332
    %v334 = vand.u32 %v333, 4294901760
    %335 = vmatpush.msra.mxu0 %v334
    %v336 = vand.u32 %v60, 4294901760
    %v337 = vsub.f32 %v60, %v336
    %v338 = vand.u32 %v337, 4294901760
    %339 = vmatpush.msra.mxu0 %v338
    %v340 = vand.u32 %v59, 4294901760
    %v341 = vsub.f32 %v59, %v340
    %v342 = vand.u32 %v341, 4294901760
    %343 = vmatpush.msra.mxu0 %v342
    %v344 = vand.u32 %v58, 4294901760
    %v345 = vsub.f32 %v58, %v344
    %v346 = vand.u32 %v345, 4294901760
    %347 = vmatpush.msra.mxu0 %v346
    %v348 = vand.u32 %v57, 4294901760
    %v349 = vsub.f32 %v57, %v348
    %v350 = vand.u32 %v349, 4294901760
    %351 = vmatpush.msra.mxu0 %v350
    %v352 = vand.u32 %v56, 4294901760
    %v353 = vsub.f32 %v56, %v352
    %v354 = vand.u32 %v353, 4294901760
    %355 = vmatpush.msra.mxu0 %v354
    %v356 = vand.u32 %v55, 4294901760
    %v357 = vsub.f32 %v55, %v356
    %v358 = vand.u32 %v357, 4294901760
    %359 = vmatpush.msra.mxu0 %v358
    %v360 = vand.u32 %v54, 4294901760
    %v361 = vsub.f32 %v54, %v360
    %v362 = vand.u32 %v361, 4294901760
    %363 = vmatpush.msra.mxu0 %v362
    %v364 = vand.u32 %v53, 4294901760
    %v365 = vsub.f32 %v53, %v364
    %v366 = vand.u32 %v365, 4294901760
    %367 = vmatpush.msra.mxu0 %v366
    %v368 = vand.u32 %v50, 4294901760
    %369 = vmatmul.f32.gmra.mxu0 %v368
    %v370 = vpop.f32.mrf.mxu0
    %v371 = vadd.f32 %v302, %v370
    %372 = vdwg.mxu0
    %v373 = vand.u32 %v68, 4294901760
    %374 = vmatpush.msra.mxu0 %v373
    %v375 = vand.u32 %v67, 4294901760
    %376 = vmatpush.msra.mxu0 %v375
    %v377 = vand.u32 %v66, 4294901760
    %378 = vmatpush.msra.mxu0 %v377
    %v379 = vand.u32 %v65, 4294901760
    %380 = vmatpush.msra.mxu0 %v379
    %v381 = vand.u32 %v64, 4294901760
    %382 = vmatpush.msra.mxu0 %v381
    %v383 = vand.u32 %v63, 4294901760
    %384 = vmatpush.msra.mxu0 %v383
    %v385 = vand.u32 %v62, 4294901760
    %386 = vmatpush.msra.mxu0 %v385
    %v387 = vand.u32 %v61, 4294901760
    %388 = vmatpush.msra.mxu0 %v387
    %v389 = vand.u32 %v60, 4294901760
    %390 = vmatpush.msra.mxu0 %v389
    %v391 = vand.u32 %v59, 4294901760
    %392 = vmatpush.msra.mxu0 %v391
    %v393 = vand.u32 %v58, 4294901760
    %394 = vmatpush.msra.mxu0 %v393
    %v395 = vand.u32 %v57, 4294901760
    %396 = vmatpush.msra.mxu0 %v395
    %v397 = vand.u32 %v56, 4294901760
    %398 = vmatpush.msra.mxu0 %v397
    %v399 = vand.u32 %v55, 4294901760
    %400 = vmatpush.msra.mxu0 %v399
    %v401 = vand.u32 %v54, 4294901760
    %402 = vmatpush.msra.mxu0 %v401
    %v403 = vand.u32 %v53, 4294901760
    %404 = vmatpush.msra.mxu0 %v403
    %v405 = vand.u32 %v50, 4294901760
    %406 = vmatmul.f32.gmra.mxu0 %v405
    %v407 = vpop.f32.mrf.mxu0
    %v408 = vadd.f32 %v371, %v407
    %409 = vdwg.mxu0
    %v410 = vmul.f32 %v408, 0.03125
    %v411 = vsub.f32 %v50, %v410
    %v412 = vmul.f32 %v411, %v411
    %v413 = vand.u32 %v68, 4294901760
    %414 = vmatpush.msra.mxu0 %v413
    %v415 = vand.u32 %v67, 4294901760
    %416 = vmatpush.msra.mxu0 %v415
    %v417 = vand.u32 %v66, 4294901760
    %418 = vmatpush.msra.mxu0 %v417
    %v419 = vand.u32 %v65, 4294901760
    %420 = vmatpush.msra.mxu0 %v419
    %v421 = vand.u32 %v64, 4294901760
    %422 = vmatpush.msra.mxu0 %v421
    %v423 = vand.u32 %v63, 4294901760
    %424 = vmatpush.msra.mxu0 %v423
    %v425 = vand.u32 %v62, 4294901760
    %426 = vmatpush.msra.mxu0 %v425
    %v427 = vand.u32 %v61, 4294901760
    %428 = vmatpush.msra.mxu0 %v427
    %v429 = vand.u32 %v60, 4294901760
    %430 = vmatpush.msra.mxu0 %v429
    %v431 = vand.u32 %v59, 4294901760
    %432 = vmatpush.msra.mxu0 %v431
    %v433 = vand.u32 %v58, 4294901760
    %434 = vmatpush.msra.mxu0 %v433
    %v435 = vand.u32 %v57, 4294901760
    %436 = vmatpush.msra.mxu0 %v435
    %v437 = vand.u32 %v56, 4294901760
    %438 = vmatpush.msra.mxu0 %v437
    %v439 = vand.u32 %v55, 4294901760
    %440 = vmatpush.msra.mxu0 %v439
    %v441 = vand.u32 %v54, 4294901760
    %442 = vmatpush.msra.mxu0 %v441
    %v443 = vand.u32 %v53, 4294901760
    %444 = vmatpush.msra.mxu0 %v443
    %v445 = vand.u32 %v412, 4294901760
    %v446 = vsub.f32 %v412, %v445
    %v447 = vand.u32 %v446, 4294901760
    %v448 = vsub.f32 %v446, %v447
    %v449 = vand.u32 %v448, 4294901760
    %450 = vmatmul.f32.gmra.mxu0 %v449
    %v451 = vpop.f32.mrf.mxu0
    %v452 = vadd.f32 0.0, %v451
    %453 = vdwg.mxu0
    %v454 = vand.u32 %v68, 4294901760
    %v455 = vsub.f32 %v68, %v454
    %v456 = vand.u32 %v455, 4294901760
    %v457 = vsub.f32 %v455, %v456
    %v458 = vand.u32 %v457, 4294901760
    %459 = vmatpush.msra.mxu0 %v458
    %v460 = vand.u32 %v67, 4294901760
    %v461 = vsub.f32 %v67, %v460
    %v462 = vand.u32 %v461, 4294901760
    %v463 = vsub.f32 %v461, %v462
    %v464 = vand.u32 %v463, 4294901760
    %465 = vmatpush.msra.mxu0 %v464
    %v466 = vand.u32 %v66, 4294901760
    %v467 = vsub.f32 %v66, %v466
    %v468 = vand.u32 %v467, 4294901760
    %v469 = vsub.f32 %v467, %v468
    %v470 = vand.u32 %v469, 4294901760
    %471 = vmatpush.msra.mxu0 %v470
    %v472 = vand.u32 %v65, 4294901760
    %v473 = vsub.f32 %v65, %v472
    %v474 = vand.u32 %v473, 4294901760
    %v475 = vsub.f32 %v473, %v474
    %v476 = vand.u32 %v475, 4294901760
    %477 = vmatpush.msra.mxu0 %v476
    %v478 = vand.u32 %v64, 4294901760
    %v479 = vsub.f32 %v64, %v478
    %v480 = vand.u32 %v479, 4294901760
    %v481 = vsub.f32 %v479, %v480
    %v482 = vand.u32 %v481, 4294901760
    %483 = vmatpush.msra.mxu0 %v482
    %v484 = vand.u32 %v63, 4294901760
    %v485 = vsub.f32 %v63, %v484
    %v486 = vand.u32 %v485, 4294901760
    %v487 = vsub.f32 %v485, %v486
    %v488 = vand.u32 %v487, 4294901760
    %489 = vmatpush.msra.mxu0 %v488
    %v490 = vand.u32 %v62, 4294901760
    %v491 = vsub.f32 %v62, %v490
    %v492 = vand.u32 %v491, 4294901760
    %v493 = vsub.f32 %v491, %v492
    %v494 = vand.u32 %v493, 4294901760
    %495 = vmatpush.msra.mxu0 %v494
    %v496 = vand.u32 %v61, 4294901760
    %v497 = vsub.f32 %v61, %v496
    %v498 = vand.u32 %v497, 4294901760
    %v499 = vsub.f32 %v497, %v498
    %v500 = vand.u32 %v499, 4294901760
    %501 = vmatpush.msra.mxu0 %v500
    %v502 = vand.u32 %v60, 4294901760
    %v503 = vsub.f32 %v60, %v502
    %v504 = vand.u32 %v503, 4294901760
    %v505 = vsub.f32 %v503, %v504
    %v506 = vand.u32 %v505, 4294901760
    %507 = vmatpush.msra.mxu0 %v506
    %v508 = vand.u32 %v59, 4294901760
    %v509 = vsub.f32 %v59, %v508
    %v510 = vand.u32 %v509, 4294901760
    %v511 = vsub.f32 %v509, %v510
    %v512 = vand.u32 %v511, 4294901760
    %513 = vmatpush.msra.mxu0 %v512
    %v514 = vand.u32 %v58, 4294901760
    %v515 = vsub.f32 %v58, %v514
    %v516 = vand.u32 %v515, 4294901760
    %v517 = vsub.f32 %v515, %v516
    %v518 = vand.u32 %v517, 4294901760
    %519 = vmatpush.msra.mxu0 %v518
    %v520 = vand.u32 %v57, 4294901760
    %v521 = vsub.f32 %v57, %v520
    %v522 = vand.u32 %v521, 4294901760
    %v523 = vsub.f32 %v521, %v522
    %v524 = vand.u32 %v523, 4294901760
    %525 = vmatpush.msra.mxu0 %v524
    %v526 = vand.u32 %v56, 4294901760
    %v527 = vsub.f32 %v56, %v526
    %v528 = vand.u32 %v527, 4294901760
    %v529 = vsub.f32 %v527, %v528
    %v530 = vand.u32 %v529, 4294901760
    %531 = vmatpush.msra.mxu0 %v530
    %v532 = vand.u32 %v55, 4294901760
    %v533 = vsub.f32 %v55, %v532
    %v534 = vand.u32 %v533, 4294901760
    %v535 = vsub.f32 %v533, %v534
    %v536 = vand.u32 %v535, 4294901760
    %537 = vmatpush.msra.mxu0 %v536
    %v538 = vand.u32 %v54, 4294901760
    %v539 = vsub.f32 %v54, %v538
    %v540 = vand.u32 %v539, 4294901760
    %v541 = vsub.f32 %v539, %v540
    %v542 = vand.u32 %v541, 4294901760
    %543 = vmatpush.msra.mxu0 %v542
    %v544 = vand.u32 %v53, 4294901760
    %v545 = vsub.f32 %v53, %v544
    %v546 = vand.u32 %v545, 4294901760
    %v547 = vsub.f32 %v545, %v546
    %v548 = vand.u32 %v547, 4294901760
    %549 = vmatpush.msra.mxu0 %v548
    %v550 = vand.u32 %v412, 4294901760
    %551 = vmatmul.f32.gmra.mxu0 %v550
    %v552 = vpop.f32.mrf.mxu0
    %v553 = vadd.f32 %v452, %v552
    %554 = vdwg.mxu0
    %v555 = vand.u32 %v68, 4294901760
    %v556 = vsub.f32 %v68, %v555
    %557 = vmatpush.msra.mxu0 %v556
    %v558 = vand.u32 %v67, 4294901760
    %v559 = vsub.f32 %v67, %v558
    %560 = vmatpush.msra.mxu0 %v559
    %v561 = vand.u32 %v66, 4294901760
    %v562 = vsub.f32 %v66, %v561
    %563 = vmatpush.msra.mxu0 %v562
    %v564 = vand.u32 %v65, 4294901760
    %v565 = vsub.f32 %v65, %v564
    %566 = vmatpush.msra.mxu0 %v565
    %v567 = vand.u32 %v64, 4294901760
    %v568 = vsub.f32 %v64, %v567
    %569 = vmatpush.msra.mxu0 %v568
    %v570 = vand.u32 %v63, 4294901760
    %v571 = vsub.f32 %v63, %v570
    %572 = vmatpush.msra.mxu0 %v571
    %v573 = vand.u32 %v62, 4294901760
    %v574 = vsub.f32 %v62, %v573
    %575 = vmatpush.msra.mxu0 %v574
    %v576 = vand.u32 %v61, 4294901760
    %v577 = vsub.f32 %v61, %v576
    %578 = vmatpush.msra.mxu0 %v577
    %v579 = vand.u32 %v60, 4294901760
    %v580 = vsub.f32 %v60, %v579
    %581 = vmatpush.msra.mxu0 %v580
    %v582 = vand.u32 %v59, 4294901760
    %v583 = vsub.f32 %v59, %v582
    %584 = vmatpush.msra.mxu0 %v583
    %v585 = vand.u32 %v58, 4294901760
    %v586 = vsub.f32 %v58, %v585
    %587 = vmatpush.msra.mxu0 %v586
    %v588 = vand.u32 %v57, 4294901760
    %v589 = vsub.f32 %v57, %v588
    %590 = vmatpush.msra.mxu0 %v589
    %v591 = vand.u32 %v56, 4294901760
    %v592 = vsub.f32 %v56, %v591
    %593 = vmatpush.msra.mxu0 %v592
    %v594 = vand.u32 %v55, 4294901760
    %v595 = vsub.f32 %v55, %v594
    %596 = vmatpush.msra.mxu0 %v595
    %v597 = vand.u32 %v54, 4294901760
    %v598 = vsub.f32 %v54, %v597
    %599 = vmatpush.msra.mxu0 %v598
    %v600 = vand.u32 %v53, 4294901760
    %v601 = vsub.f32 %v53, %v600
    %602 = vmatpush.msra.mxu0 %v601
    %v603 = vand.u32 %v412, 4294901760
    %v604 = vsub.f32 %v412, %v603
    %605 = vmatmul.f32.gmra.mxu0 %v604
    %v606 = vpop.f32.mrf.mxu0
    %v607 = vadd.f32 %v553, %v606
    %608 = vdwg.mxu0
    %v609 = vand.u32 %v68, 4294901760
    %610 = vmatpush.msra.mxu0 %v609
    %v611 = vand.u32 %v67, 4294901760
    %612 = vmatpush.msra.mxu0 %v611
    %v613 = vand.u32 %v66, 4294901760
    %614 = vmatpush.msra.mxu0 %v613
    %v615 = vand.u32 %v65, 4294901760
    %616 = vmatpush.msra.mxu0 %v615
    %v617 = vand.u32 %v64, 4294901760
    %618 = vmatpush.msra.mxu0 %v617
    %v619 = vand.u32 %v63, 4294901760
    %620 = vmatpush.msra.mxu0 %v619
    %v621 = vand.u32 %v62, 4294901760
    %622 = vmatpush.msra.mxu0 %v621
    %v623 = vand.u32 %v61, 4294901760
    %624 = vmatpush.msra.mxu0 %v623
    %v625 = vand.u32 %v60, 4294901760
    %626 = vmatpush.msra.mxu0 %v625
    %v627 = vand.u32 %v59, 4294901760
    %628 = vmatpush.msra.mxu0 %v627
    %v629 = vand.u32 %v58, 4294901760
    %630 = vmatpush.msra.mxu0 %v629
    %v631 = vand.u32 %v57, 4294901760
    %632 = vmatpush.msra.mxu0 %v631
    %v633 = vand.u32 %v56, 4294901760
    %634 = vmatpush.msra.mxu0 %v633
    %v635 = vand.u32 %v55, 4294901760
    %636 = vmatpush.msra.mxu0 %v635
    %v637 = vand.u32 %v54, 4294901760
    %638 = vmatpush.msra.mxu0 %v637
    %v639 = vand.u32 %v53, 4294901760
    %640 = vmatpush.msra.mxu0 %v639
    %v641 = vand.u32 %v412, 4294901760
    %v642 = vsub.f32 %v412, %v641
    %v643 = vand.u32 %v642, 4294901760
    %644 = vmatmul.f32.gmra.mxu0 %v643
    %v645 = vpop.f32.mrf.mxu0
    %v646 = vadd.f32 %v607, %v645
    %647 = vdwg.mxu0
    %v648 = vand.u32 %v68, 4294901760
    %v649 = vsub.f32 %v68, %v648
    %v650 = vand.u32 %v649, 4294901760
    %651 = vmatpush.msra.mxu0 %v650
    %v652 = vand.u32 %v67, 4294901760
    %v653 = vsub.f32 %v67, %v652
    %v654 = vand.u32 %v653, 4294901760
    %655 = vmatpush.msra.mxu0 %v654
    %v656 = vand.u32 %v66, 4294901760
    %v657 = vsub.f32 %v66, %v656
    %v658 = vand.u32 %v657, 4294901760
    %659 = vmatpush.msra.mxu0 %v658
    %v660 = vand.u32 %v65, 4294901760
    %v661 = vsub.f32 %v65, %v660
    %v662 = vand.u32 %v661, 4294901760
    %663 = vmatpush.msra.mxu0 %v662
    %v664 = vand.u32 %v64, 4294901760
    %v665 = vsub.f32 %v64, %v664
    %v666 = vand.u32 %v665, 4294901760
    %667 = vmatpush.msra.mxu0 %v666
    %v668 = vand.u32 %v63, 4294901760
    %v669 = vsub.f32 %v63, %v668
    %v670 = vand.u32 %v669, 4294901760
    %671 = vmatpush.msra.mxu0 %v670
    %v672 = vand.u32 %v62, 4294901760
    %v673 = vsub.f32 %v62, %v672
    %v674 = vand.u32 %v673, 4294901760
    %675 = vmatpush.msra.mxu0 %v674
    %v676 = vand.u32 %v61, 4294901760
    %v677 = vsub.f32 %v61, %v676
    %v678 = vand.u32 %v677, 4294901760
    %679 = vmatpush.msra.mxu0 %v678
    %v680 = vand.u32 %v60, 4294901760
    %v681 = vsub.f32 %v60, %v680
    %v682 = vand.u32 %v681, 4294901760
    %683 = vmatpush.msra.mxu0 %v682
    %v684 = vand.u32 %v59, 4294901760
    %v685 = vsub.f32 %v59, %v684
    %v686 = vand.u32 %v685, 4294901760
    %687 = vmatpush.msra.mxu0 %v686
    %v688 = vand.u32 %v58, 4294901760
    %v689 = vsub.f32 %v58, %v688
    %v690 = vand.u32 %v689, 4294901760
    %691 = vmatpush.msra.mxu0 %v690
    %v692 = vand.u32 %v57, 4294901760
    %v693 = vsub.f32 %v57, %v692
    %v694 = vand.u32 %v693, 4294901760
    %695 = vmatpush.msra.mxu0 %v694
    %v696 = vand.u32 %v56, 4294901760
    %v697 = vsub.f32 %v56, %v696
    %v698 = vand.u32 %v697, 4294901760
    %699 = vmatpush.msra.mxu0 %v698
    %v700 = vand.u32 %v55, 4294901760
    %v701 = vsub.f32 %v55, %v700
    %v702 = vand.u32 %v701, 4294901760
    %703 = vmatpush.msra.mxu0 %v702
    %v704 = vand.u32 %v54, 4294901760
    %v705 = vsub.f32 %v54, %v704
    %v706 = vand.u32 %v705, 4294901760
    %707 = vmatpush.msra.mxu0 %v706
    %v708 = vand.u32 %v53, 4294901760
    %v709 = vsub.f32 %v53, %v708
    %v710 = vand.u32 %v709, 4294901760
    %711 = vmatpush.msra.mxu0 %v710
    %v712 = vand.u32 %v412, 4294901760
    %713 = vmatmul.f32.gmra.mxu0 %v712
    %v714 = vpop.f32.mrf.mxu0
    %v715 = vadd.f32 %v646, %v714
    %716 = vdwg.mxu0
    %v717 = vand.u32 %v68, 4294901760
    %718 = vmatpush.msra.mxu0 %v717
    %v719 = vand.u32 %v67, 4294901760
    %720 = vmatpush.msra.mxu0 %v719
    %v721 = vand.u32 %v66, 4294901760
    %722 = vmatpush.msra.mxu0 %v721
    %v723 = vand.u32 %v65, 4294901760
    %724 = vmatpush.msra.mxu0 %v723
    %v725 = vand.u32 %v64, 4294901760
    %726 = vmatpush.msra.mxu0 %v725
    %v727 = vand.u32 %v63, 4294901760
    %728 = vmatpush.msra.mxu0 %v727
    %v729 = vand.u32 %v62, 4294901760
    %730 = vmatpush.msra.mxu0 %v729
    %v731 = vand.u32 %v61, 4294901760
    %732 = vmatpush.msra.mxu0 %v731
    %v733 = vand.u32 %v60, 4294901760
    %734 = vmatpush.msra.mxu0 %v733
    %v735 = vand.u32 %v59, 4294901760
    %736 = vmatpush.msra.mxu0 %v735
    %v737 = vand.u32 %v58, 4294901760
    %738 = vmatpush.msra.mxu0 %v737
    %v739 = vand.u32 %v57, 4294901760
    %740 = vmatpush.msra.mxu0 %v739
    %v741 = vand.u32 %v56, 4294901760
    %742 = vmatpush.msra.mxu0 %v741
    %v743 = vand.u32 %v55, 4294901760
    %744 = vmatpush.msra.mxu0 %v743
    %v745 = vand.u32 %v54, 4294901760
    %746 = vmatpush.msra.mxu0 %v745
    %v747 = vand.u32 %v53, 4294901760
    %748 = vmatpush.msra.mxu0 %v747
    %v749 = vand.u32 %v412, 4294901760
    %750 = vmatmul.f32.gmra.mxu0 %v749
    %v751 = vpop.f32.mrf.mxu0
    %v752 = vadd.f32 %v715, %v751
    %753 = vdwg.mxu0
    %v754 = vmul.f32 %v752, 0.032258064
    %v755 = vrsqrt.pop %v754
    %v756 = vmul.f32 %v755, %v754
    %v757 = vmul.f32 %v756, %v755
    %v758 = vmul.f32 0.5, %v757
    %v759 = vsub.f32 1.5, %v758
    %v760 = vmul.f32 %v755, %v759
    %v761 = vmul.f32 %v754, %v760
    %vm762 = vcmp.eq.f32.partialorder %v754, inf
    %v763 = vsel %vm762, %v754, %v761
    %vm764 = vcmp.eq.f32.partialorder %v754, 0.0
    %v765 = vand.u32 %v754, 2147483648
    %v766 = vsel %vm764, %v765, %v763
    %v767 = vadd.f32 %v766, 1e-06
    %v768 = vrcp.pop %v767
    %v769 = vmul.f32 %v767, %v768
    %v770 = vsub.f32 1.0, %v769
    %v771 = vmul.f32 %v768, %v770
    %v772 = vadd.f32 %v768, %v771
    %vm773 = vweird.f32 %v767
    %vm774 = vweird.f32 %v768
    %vm775 = vmor %vm773, %vm774
    %v776 = vsel %vm775, %v768, %v772
    %v777 = vand.u32 2147483647, %v767
    %vm778 = vcmp.eq.f32.partialorder %v777, 8.507059e+37
    %v779 = vand.u32 %v767, 2147483648
    %v780 = vor.u32 1.1754944e-38, %v779
    %v781 = vsel %vm778, %v780, %v776
    %v782 = vmul.f32 %v411, %v781
    %v784 = vperm.slane %v51, 0
    %v786 = vmul.f32 %v784, %v782
    %v788 = vperm.slane %v52, 0
    %v790 = vadd.f32 %v786, %v788
    %791 = vst [vmem:[#allocation7] sm:$0xff] %v790
    // Predicated region
    $region26: #{tpu_custom_call.1} parent=1 // pred_check
      _
    $region27: #{tpu_custom_call.1} parent=1 // pred_check_branch
      %793 = sbr.rel (0) target = $region29
    $region28: #{tpu_custom_call.1} parent=1 // pred_region
      %795 = vsyncadd [#allocation4], 64
      %s796 = sshll.u32 [#allocation7], 4
      %s797 = int_to_ptr.vmem [resolvable:$true] %s796
      %s798 = sshll.u32 %s4, 4
      %s799 = int_to_ptr.hbm [resolvable:$true] %s798
      %804 = dma.vmem_to_hbm [thread:$0]  %s797, 64, %s799, [#allocation4], 64, 64, 4
    $region29: #{tpu_custom_call.1} parent=1 // pred_fallthru
      _
    // Predicated region
    $region30: #{tpu_custom_call.1} parent=1 // pred_check
      _
    $region31: #{tpu_custom_call.1} parent=1 // pred_check_branch
      %806 = sbr.rel (0) target = $region33
    $region32: #{tpu_custom_call.1} parent=1 // pred_region
      %808 = dma.done [#allocation4], 128
    $region33: #{tpu_custom_call.1} parent=1 // pred_fallthru
      _
    %809 = vsyncpa [#allocation3], 1
    %810 = vsyncpa [#allocation6], 1
    %811 = vsyncpa [#allocation4], 1

</llo_original>
